<compile_context>
chip_gen: v7x
topology: tpu7x:2x2x1
jax: 0.10.0
libtpu: 0.0.40
codegen_flags: <defaults>
</compile_context>

<pallas_src>
import functools

import jax
import jax.numpy as jnp
from jax.experimental import pallas as pl
from jax.experimental.pallas import tpu as pltpu

_PAIRWISE_EPS = 1e-6  # matches torch.nn.functional.pairwise_distance default eps


def _contrastive_loss_kernel(x1_ref, x2_ref, label_ref, part_ref, *,
                             margin, n_rows, block_rows):
    i = pl.program_id(0)

    # Upcast after load: HBM traffic stays in the input dtype (e.g. bf16).
    x1 = x1_ref[...].astype(jnp.float32)                      # (TN, D)
    x2 = x2_ref[...].astype(jnp.float32)                      # (TN, D)
    label = label_ref[...].astype(jnp.float32)                # (TN, 1)

    diff = x1 - x2 + _PAIRWISE_EPS                            # VPU elementwise
    sq_dist = jnp.sum(diff * diff, axis=-1, keepdims=True)    # (TN, 1) lane reduce (XLU)
    dist = jnp.sqrt(sq_dist)                                  # EUP; only needed for hinge

    pos_term = (1.0 - label) * sq_dist                        # use sq_dist directly (no d*d)
    hinge = jnp.maximum(margin - dist, 0.0)                   # clamp(margin - d, min=0)
    neg_term = label * (hinge * hinge)
    per_row = pos_term + neg_term                             # (TN, 1)

    # Mask padded rows of the tail block (select -> safe even if padding is NaN).
    row_idx = i * block_rows + jax.lax.broadcasted_iota(jnp.int32, per_row.shape, 0)
    per_row = jnp.where(row_idx < n_rows, per_row, 0.0)

    partial = jnp.sum(per_row)                                # this block's raw sum

    # Write into this block's private (8, 128) output tile: partial at [0, 0],
    # zeros elsewhere, so the wrapper can just jnp.sum() all partial tiles.
    r = jax.lax.broadcasted_iota(jnp.int32, (8, 128), 0)
    c = jax.lax.broadcasted_iota(jnp.int32, (8, 128), 1)
    part_ref[...] = jnp.where((r == 0) & (c == 0), partial, 0.0)


def contrastive_loss(output1, output2, label, margin=2.0, block_rows=512):
    """Pallas implementation of ContrastiveLoss.forward.

    output1, output2: (N, D) float32 / bfloat16 embeddings
    label:            (N, 1) (0 = similar pair, 1 = dissimilar pair)
    returns:          scalar float32
    """
    N, D = output1.shape
    assert output2.shape == (N, D)
    assert label.shape == (N, 1)

    # Label is tiny (N x 1); cast once here so any int/bool label dtype works.
    label = label.astype(jnp.float32)

    # Row-tile size: multiple of 16 sublanes, capped so the double-buffered
    # x1+x2 streams (2 inputs x 2 buffers x TN x D) stay under ~12 MiB of VMEM.
    itemsize = max(jnp.dtype(output1.dtype).itemsize, jnp.dtype(output2.dtype).itemsize)
    vmem_budget = 12 * 1024 * 1024
    max_tn = max(16, vmem_budget // (2 * 2 * D * itemsize))
    tn = max(16, (min(block_rows, max_tn) // 16) * 16)
    grid = pl.cdiv(N, tn)

    kernel = functools.partial(_contrastive_loss_kernel, margin=float(margin),
                               n_rows=N, block_rows=tn)

    bytes_accessed = 2 * N * D * itemsize + N * 4 + grid * 8 * 128 * 4
    cost = pl.CostEstimate(flops=5 * N * D, transcendentals=N,
                           bytes_accessed=bytes_accessed)

    partials = pl.pallas_call(
        kernel,
        out_shape=jax.ShapeDtypeStruct((8 * grid, 128), jnp.float32),
        grid=(grid,),
        in_specs=[
            pl.BlockSpec((tn, D), lambda i: (i, 0)),   # output1 stream
            pl.BlockSpec((tn, D), lambda i: (i, 0)),   # output2 stream
            pl.BlockSpec((tn, 1), lambda i: (i, 0)),   # label
        ],
        out_specs=pl.BlockSpec((8, 128), lambda i: (i, 0)),
        compiler_params=pltpu.CompilerParams(dimension_semantics=("parallel",)),
        cost_estimate=cost,
    )(output1, output2, label)

    # Finalize: raw sum of all block partials, divided by the true N.
    return jnp.sum(partials) / jnp.float32(N)


def _reference_contrastive_loss(output1, output2, label, margin=2.0):
    # Pure-JAX reference mirroring the PyTorch semantics.
    diff = output1.astype(jnp.float32) - output2.astype(jnp.float32) + _PAIRWISE_EPS
    dist = jnp.sqrt(jnp.sum(diff * diff, axis=-1, keepdims=True))
    label = label.astype(jnp.float32)
    loss = (1.0 - label) * dist**2 + label * jnp.maximum(margin - dist, 0.0) ** 2
    return jnp.mean(loss)


if __name__ == "__main__":
    key = jax.random.PRNGKey(0)
    k1, k2, k3 = jax.random.split(key, 3)

    # Small Siamese-embedding-like batch; N deliberately NOT a multiple of the
    # row tile so the multi-block + tail-masking path is exercised
    # (block_rows=16 -> 3 grid steps, last one half-padded).
    N, D = 40, 32
    x1_f32 = jax.random.normal(k1, (N, D), dtype=jnp.float32)
    x2_f32 = jax.random.normal(k2, (N, D), dtype=jnp.float32)
    label = jax.random.bernoulli(k3, 0.5, (N, 1)).astype(jnp.float32)

    loss = contrastive_loss(x1_f32, x2_f32, label, margin=2.0, block_rows=16)
    loss = jax.block_until_ready(loss)
    ref = _reference_contrastive_loss(x1_f32, x2_f32, label, margin=2.0)
    assert jnp.allclose(loss, ref, rtol=1e-5, atol=1e-5), (loss, ref)

    # bf16 embeddings stream at native width and are upcast inside the kernel.
    x1_bf16 = x1_f32.astype(jnp.bfloat16)
    x2_bf16 = x2_f32.astype(jnp.bfloat16)
    loss_bf16 = contrastive_loss(x1_bf16, x2_bf16, label, margin=2.0, block_rows=16)
    loss_bf16 = jax.block_until_ready(loss_bf16)
    ref_bf16 = _reference_contrastive_loss(x1_bf16, x2_bf16, label, margin=2.0)
    assert jnp.allclose(loss_bf16, ref_bf16, rtol=1e-5, atol=1e-5), (loss_bf16, ref_bf16)

    print("KERNEL_OK")
</pallas_src>

<mosaic_0001>
module attributes {stable_mosaic.version = 11 : i64} {
  func.func @_contrastive_loss_kernel(%arg0: i32, %arg1: memref<16x32xf32, #tpu.memory_space<vmem>>, %arg2: memref<16x32xf32, #tpu.memory_space<vmem>>, %arg3: memref<16x1xf32, #tpu.memory_space<vmem>>, %arg4: memref<8x128xf32, #tpu.memory_space<vmem>>) attributes {dimension_semantics = [#tpu.dimension_semantics<parallel>], iteration_bounds = array<i64: 3>, scalar_prefetch = 0 : i64, scratch_operands = 0 : i64, tpu.core_type = #tpu.core_type<tc>, window_params = [{transform_indices = @transform_0, window_bounds = array<i64: 16, 32>}, {transform_indices = @transform_1, window_bounds = array<i64: 16, 32>}, {transform_indices = @transform_2, window_bounds = array<i64: 16, 1>}, {transform_indices = @transform_3, window_bounds = array<i64: 8, 128>}]} {
    %c0 = arith.constant 0 : index
    %c0_0 = arith.constant 0 : index
    %0 = vector.load %arg1[%c0, %c0_0] : memref<16x32xf32, #tpu.memory_space<vmem>>, vector<16x32xf32>
    %c0_1 = arith.constant 0 : index
    %c0_2 = arith.constant 0 : index
    %1 = vector.load %arg2[%c0_1, %c0_2] : memref<16x32xf32, #tpu.memory_space<vmem>>, vector<16x32xf32>
    %c0_3 = arith.constant 0 : index
    %c0_4 = arith.constant 0 : index
    %2 = vector.load %arg3[%c0_3, %c0_4] : memref<16x1xf32, #tpu.memory_space<vmem>>, vector<16x1xf32>
    %3 = arith.subf %0, %1 : vector<16x32xf32>
    %cst = arith.constant 9.99999997E-7 : f32
    %4 = vector.broadcast %cst : f32 to vector<16x32xf32>
    %5 = arith.addf %3, %4 : vector<16x32xf32>
    %6 = arith.mulf %5, %5 : vector<16x32xf32>
    %cst_5 = arith.constant dense<0.000000e+00> : vector<16xf32>
    %7 = vector.multi_reduction <add>, %6, %cst_5 [1] : vector<16x32xf32> to vector<16xf32>
    %8 = vector.shape_cast %7 : vector<16xf32> to vector<16x1xf32>
    %9 = math.sqrt %8 : vector<16x1xf32>
    %cst_6 = arith.constant 1.000000e+00 : f32
    %10 = vector.broadcast %cst_6 : f32 to vector<16x1xf32>
    %11 = arith.subf %10, %2 : vector<16x1xf32>
    %12 = arith.mulf %11, %8 : vector<16x1xf32>
    %cst_7 = arith.constant 2.000000e+00 : f32
    %13 = vector.broadcast %cst_7 : f32 to vector<16x1xf32>
    %14 = arith.subf %13, %9 : vector<16x1xf32>
    %cst_8 = arith.constant 0.000000e+00 : f32
    %15 = vector.broadcast %cst_8 : f32 to vector<16x1xf32>
    %16 = arith.maximumf %14, %15 : vector<16x1xf32>
    %17 = arith.mulf %16, %16 : vector<16x1xf32>
    %18 = arith.mulf %2, %17 : vector<16x1xf32>
    %19 = arith.addf %12, %18 : vector<16x1xf32>
    %c16_i32 = arith.constant 16 : i32
    %20 = arith.muli %arg0, %c16_i32 : i32
    %21 = tpu.iota {dimensions = array<i32: 0>} : vector<16x1xi32>
    %22 = vector.broadcast %20 : i32 to vector<16x1xi32>
    %23 = arith.addi %22, %21 : vector<16x1xi32>
    %c40_i32 = arith.constant 40 : i32
    %24 = vector.broadcast %c40_i32 : i32 to vector<16x1xi32>
    %25 = arith.cmpi slt, %23, %24 : vector<16x1xi32>
    %cst_9 = arith.constant 0.000000e+00 : f32
    %26 = vector.broadcast %cst_9 : f32 to vector<16x1xf32>
    %27 = arith.select %25, %19, %26 : vector<16x1xi1>, vector<16x1xf32>
    %28 = vector.shape_cast %27 : vector<16x1xf32> to vector<1x16x1xf32>
    %cst_10 = arith.constant dense<0.000000e+00> : vector<1xf32>
    %29 = vector.multi_reduction <add>, %28, %cst_10 [1, 2] : vector<1x16x1xf32> to vector<1xf32>
    %30 = vector.shape_cast %29 : vector<1xf32> to vector<1x1x1xf32>
    %31 = vector.extract %30[0, 0, 0] : f32 from vector<1x1x1xf32>
    %32 = tpu.iota {dimensions = array<i32: 0>} : vector<8x128xi32>
    %33 = tpu.iota {dimensions = array<i32: 1>} : vector<8x128xi32>
    %c0_i32 = arith.constant 0 : i32
    %34 = vector.broadcast %c0_i32 : i32 to vector<8x128xi32>
    %35 = arith.cmpi eq, %32, %34 : vector<8x128xi32>
    %c0_i32_11 = arith.constant 0 : i32
    %36 = vector.broadcast %c0_i32_11 : i32 to vector<8x128xi32>
    %37 = arith.cmpi eq, %33, %36 : vector<8x128xi32>
    %38 = arith.andi %35, %37 : vector<8x128xi1>
    %cst_12 = arith.constant 0.000000e+00 : f32
    %39 = vector.broadcast %31 : f32 to vector<8x128xf32>
    %40 = vector.broadcast %cst_12 : f32 to vector<8x128xf32>
    %41 = arith.select %38, %39, %40 : vector<8x128xi1>, vector<8x128xf32>
    %c0_13 = arith.constant 0 : index
    %c0_14 = arith.constant 0 : index
    %42 = vector.load %arg4[%c0_13, %c0_14] : memref<8x128xf32, #tpu.memory_space<vmem>>, vector<8x128xf32>
    tpu.vector_store %arg4[%c0_13, %c0_14], %41 {strides = array<i32>} : memref<8x128xf32, #tpu.memory_space<vmem>>, vector<8x128xf32>,
    return
  }
  func.func @transform_0(%arg0: i32) -> (i32, i32) {
    %c0_i32 = arith.constant 0 : i32
    %c0_i32_0 = arith.constant 0 : i32
    return %arg0, %c0_i32 : i32, i32
  }
  func.func @transform_1(%arg0: i32) -> (i32, i32) {
    %c0_i32 = arith.constant 0 : i32
    %c0_i32_0 = arith.constant 0 : i32
    return %arg0, %c0_i32 : i32, i32
  }
  func.func @transform_2(%arg0: i32) -> (i32, i32) {
    %c0_i32 = arith.constant 0 : i32
    %c0_i32_0 = arith.constant 0 : i32
    return %arg0, %c0_i32 : i32, i32
  }
  func.func @transform_3(%arg0: i32) -> (i32, i32) {
    %c0_i32 = arith.constant 0 : i32
    %c0_i32_0 = arith.constant 0 : i32
    return %arg0, %c0_i32 : i32, i32
  }
}

</mosaic_0001>

<llo_original>
// kernel: tpu_custom_call.1
$region0: #{tpu_custom_call.1}
  #allocation0 [shape = 'u32[]', space=smem, size = 0x4, offset = 0x4, fixed_abs, tag = 'smem constant byte address 0x4 - core index']
  #allocation1 [shape = 'u32[144,128]{1,0:T(1,128)}', space=vmem, size = 0x12000, scoped, tag = 'internal scratch']
  %s0 = inlined_call_operand.vmem [shape: f32[40,32], index: 0, kind: input, shape index: {}]
  %s1 = inlined_call_operand.vmem [shape: f32[40,32], index: 1, kind: input, shape index: {}]
  %s2 = inlined_call_operand.vmem [shape: f32[40,1], index: 2, kind: input, shape index: {}]
  %s3 = inlined_call_operand.hbm [shape: f32[24,128], index: 3, kind: output, shape index: {}]
  %s4 = sld [smem:[#allocation0]]
  $region45: #{tpu_custom_call.1} parent=0
    _
  %s6 = ssub.s32 1, %s4
  %s7 = scalar_select 0, %s6, %s4
  $region1: #{tpu_custom_call.1} parent=0
    #allocation2 [shape = 'u8[8192]{0}', space=vmem, size = 0x2000, scoped, tag = 'output window, operand 0']
    #allocation3 [shape = 's32[2]{0}', space=sflag, size = 0x8, scoped, tag = 'scoped memory for tpu_custom_call.1']
    %8 = vsyncpa [#allocation3], 0
    %s9 = scalar_lea.sflag [#allocation3], 1
    %10 = vsyncpa %s9, 0
    loop: start=0, step=1, limit=5
    $region2: #{tpu_custom_call.1} parent=1 // loop_pre_header
      _
    $region3: #{tpu_custom_call.1} parent=1 // loop_header
      %s12 = sphi 0, %s16
      %p13 = scmp.ge.s32.totalorder %s12, 5
      %s22 = sphi 0, %s24
      %s25 = sphi 0, %s22
      %s26 = sphi 0, %s25
      %s42 = sphi 0, %s26
      %s48 = sphi 0, %s50
      %s51 = sphi 0, %s48
      %s52 = sphi 0, %s51
      %s68 = sphi 0, %s52
      %s74 = sphi 0, %s76
      %s77 = sphi 0, %s74
      %s78 = sphi 0, %s77
      %s94 = sphi 0, %s78
      %s100 = sphi 0, %s102
      %s103 = sphi 0, %s100
      %s104 = sphi 0, %s103
      %s120 = sphi 0, %s104
    $region4: #{tpu_custom_call.1} parent=1 // loop_header_branch
      %15 = sbr.rel (%p13) target = $region8
    $region5: #{tpu_custom_call.1} parent=1 // loop_body
      %s17 = ssub.s32 %s12, 1
      %s18 = ssub.s32 %s12, 2
      %s19 = sadd.s32 %s12, 1
      %s20 = ssub.s32 %s12, %s19
      %p21 = scmp.eq.s32.totalorder %s20, 0
      %s23 = sadd.s32 %s22, 1
      %s24 = scalar_select %p21, %s22, %s23
      %p27 = pneg %p21
      %p28 = scmp.eq.s32.totalorder %s12, 2
      %p29 = por %p27, %p28
      %p30 = scmp.ne.s32.totalorder %s22, %s25
      %p31 = scmp.eq.s32.totalorder %s12, 0
      %p32 = por %p30, %p31
      %p33 = scmp.ne.s32.totalorder %s22, %s25
      %p34 = scmp.eq.s32.totalorder %s17, 2
      %p35 = por %p33, %p34
      %p36 = scmp.ne.s32.totalorder %s25, %s26
      %p37 = scmp.eq.s32.totalorder %s17, 0
      %p38 = por %p36, %p37
      %p39 = scmp.ne.s32.totalorder %s25, %s26
      %p40 = scmp.eq.s32.totalorder %s18, 2
      %p41 = por %p39, %p40
      %p43 = scmp.ne.s32.totalorder %s26, %s42
      %p44 = scmp.eq.s32.totalorder %s18, 0
      %p45 = por %p43, %p44
      %s46 = ssub.s32 %s12, %s19
      %p47 = scmp.eq.s32.totalorder %s46, 0
      %s49 = sadd.s32 %s48, 1
      %s50 = scalar_select %p47, %s48, %s49
      %p53 = pneg %p47
      %p54 = scmp.eq.s32.totalorder %s12, 2
      %p55 = por %p53, %p54
      %p56 = scmp.ne.s32.totalorder %s48, %s51
      %p57 = scmp.eq.s32.totalorder %s12, 0
      %p58 = por %p56, %p57
      %p59 = scmp.ne.s32.totalorder %s48, %s51
      %p60 = scmp.eq.s32.totalorder %s17, 2
      %p61 = por %p59, %p60
      %p62 = scmp.ne.s32.totalorder %s51, %s52
      %p63 = scmp.eq.s32.totalorder %s17, 0
      %p64 = por %p62, %p63
      %p65 = scmp.ne.s32.totalorder %s51, %s52
      %p66 = scmp.eq.s32.totalorder %s18, 2
      %p67 = por %p65, %p66
      %p69 = scmp.ne.s32.totalorder %s52, %s68
      %p70 = scmp.eq.s32.totalorder %s18, 0
      %p71 = por %p69, %p70
      %s72 = ssub.s32 %s12, %s19
      %p73 = scmp.eq.s32.totalorder %s72, 0
      %s75 = sadd.s32 %s74, 1
      %s76 = scalar_select %p73, %s74, %s75
      %p79 = pneg %p73
      %p80 = scmp.eq.s32.totalorder %s12, 2
      %p81 = por %p79, %p80
      %p82 = scmp.ne.s32.totalorder %s74, %s77
      %p83 = scmp.eq.s32.totalorder %s12, 0
      %p84 = por %p82, %p83
      %p85 = scmp.ne.s32.totalorder %s74, %s77
      %p86 = scmp.eq.s32.totalorder %s17, 2
      %p87 = por %p85, %p86
      %p88 = scmp.ne.s32.totalorder %s77, %s78
      %p89 = scmp.eq.s32.totalorder %s17, 0
      %p90 = por %p88, %p89
      %p91 = scmp.ne.s32.totalorder %s77, %s78
      %p92 = scmp.eq.s32.totalorder %s18, 2
      %p93 = por %p91, %p92
      %p95 = scmp.ne.s32.totalorder %s78, %s94
      %p96 = scmp.eq.s32.totalorder %s18, 0
      %p97 = por %p95, %p96
      %s98 = ssub.s32 %s12, %s19
      %p99 = scmp.eq.s32.totalorder %s98, 0
      %s101 = sadd.s32 %s100, 1
      %s102 = scalar_select %p99, %s100, %s101
      %p105 = pneg %p99
      %p106 = scmp.eq.s32.totalorder %s12, 2
      %p107 = por %p105, %p106
      %p108 = scmp.ne.s32.totalorder %s100, %s103
      %p109 = scmp.eq.s32.totalorder %s12, 0
      %p110 = por %p108, %p109
      %p111 = scmp.ne.s32.totalorder %s100, %s103
      %p112 = scmp.eq.s32.totalorder %s17, 2
      %p113 = por %p111, %p112
      %p114 = scmp.ne.s32.totalorder %s103, %s104
      %p115 = scmp.eq.s32.totalorder %s17, 0
      %p116 = por %p114, %p115
      %p117 = scmp.ne.s32.totalorder %s103, %s104
      %p118 = scmp.eq.s32.totalorder %s18, 2
      %p119 = por %p117, %p118
      %p121 = scmp.ne.s32.totalorder %s104, %s120
      %p122 = scmp.eq.s32.totalorder %s18, 0
      %p123 = por %p121, %p122
      %p124 = scmp.le.s32.totalorder 1, %s12
      %p125 = scmp.lt.s32.totalorder %s12, 4
      %p126 = pnand %p124, %p125
      %p127 = pneg %p126
      // Predicated region
      $region9: #{tpu_custom_call.1} parent=5 // pred_check
        _
      $region10: #{tpu_custom_call.1} parent=5 // pred_check_branch
        %129 = sbr.rel (%p126) target = $region12
      $region11: #{tpu_custom_call.1} parent=5 // pred_region
        %s130 = ssub.s32 %s12, 1
      $region12: #{tpu_custom_call.1} parent=5 // pred_fallthru
        _
      %p131 = scmp.lt.s32.totalorder %s12, 3
      // Predicated region
      $region13: #{tpu_custom_call.1} parent=5 // pred_check
        %p132 = pneg %p131
      $region14: #{tpu_custom_call.1} parent=5 // pred_check_branch
        %134 = sbr.rel (%p132) target = $region16
      $region15: #{tpu_custom_call.1} parent=5 // pred_region
        // Predicated region
        $region17: #{tpu_custom_call.1} parent=15 // pred_check
          %p135 = pneg %p32
        $region18: #{tpu_custom_call.1} parent=15 // pred_check_branch
          %137 = sbr.rel (%p135) target = $region20
        $region19: #{tpu_custom_call.1} parent=15 // pred_region
          %s138 = smul.u32 2, %s12
          %s139 = ssub.s32 5, %s138
          %p140 = scmp.lt.s32.totalorder %s139, 2
          %s141 = scalar_select %p140, %s139, 2
          %s142 = smul.u32 128, %s141
          %p143 = scmp.lt.s32.totalorder %s138, 4
          %s144 = scalar_select %p143, %s138, 4
          %s145 = smul.addr %s144, 8
          %s146 = scalar_lea.vmem %s0, %s145
          %s147 = smul.u32 2, %s12
          %s148 = ssub.s32 5, %s147
          %p149 = scmp.lt.s32.totalorder %s148, 2
          %s150 = scalar_select %p149, %s148, 2
          %s151 = smul.u32 128, %s150
        $region20: #{tpu_custom_call.1} parent=15 // pred_fallthru
          _
        // Predicated region
        $region21: #{tpu_custom_call.1} parent=15 // pred_check
          %p152 = pneg %p58
        $region22: #{tpu_custom_call.1} parent=15 // pred_check_branch
          %154 = sbr.rel (%p152) target = $region24
        $region23: #{tpu_custom_call.1} parent=15 // pred_region
          %s155 = smul.u32 2, %s12
          %s156 = ssub.s32 5, %s155
          %p157 = scmp.lt.s32.totalorder %s156, 2
          %s158 = scalar_select %p157, %s156, 2
          %s159 = smul.u32 128, %s158
          %p160 = scmp.lt.s32.totalorder %s155, 4
          %s161 = scalar_select %p160, %s155, 4
          %s162 = smul.addr %s161, 8
          %s163 = scalar_lea.vmem %s1, %s162
          %s164 = smul.u32 2, %s12
          %s165 = ssub.s32 5, %s164
          %p166 = scmp.lt.s32.totalorder %s165, 2
          %s167 = scalar_select %p166, %s165, 2
          %s168 = smul.u32 128, %s167
        $region24: #{tpu_custom_call.1} parent=15 // pred_fallthru
          _
        // Predicated region
        $region25: #{tpu_custom_call.1} parent=15 // pred_check
          %p169 = pneg %p84
        $region26: #{tpu_custom_call.1} parent=15 // pred_check_branch
          %171 = sbr.rel (%p169) target = $region28
        $region27: #{tpu_custom_call.1} parent=15 // pred_region
          %s172 = smul.u32 2, %s12
          %s173 = ssub.s32 5, %s172
          %p174 = scmp.lt.s32.totalorder %s173, 2
          %s175 = scalar_select %p174, %s173, 2
          %s176 = smul.u32 128, %s175
          %p177 = scmp.lt.s32.totalorder %s172, 4
          %s178 = scalar_select %p177, %s172, 4
          %s179 = smul.addr %s178, 8
          %s180 = scalar_lea.vmem %s2, %s179
          %s181 = smul.u32 2, %s12
          %s182 = ssub.s32 5, %s181
          %p183 = scmp.lt.s32.totalorder %s182, 2
          %s184 = scalar_select %p183, %s182, 2
          %s185 = smul.u32 128, %s184
        $region28: #{tpu_custom_call.1} parent=15 // pred_fallthru
          _
      $region16: #{tpu_custom_call.1} parent=5 // pred_fallthru
        _
      %p186 = scmp.le.s32.totalorder 1, %s12
      %p187 = scmp.lt.s32.totalorder %s12, 4
      %p188 = pnand %p186, %p187
      %p189 = pneg %p188
      // Predicated region
      $region29: #{tpu_custom_call.1} parent=5 // pred_check
        _
      $region30: #{tpu_custom_call.1} parent=5 // pred_check_branch
        %191 = sbr.rel (%p188) target = $region32
      $region31: #{tpu_custom_call.1} parent=5 // pred_region
        %s192 = ssub.s32 %s12, 1
        %s193 = smul.u32 2, %s17
        %s194 = ssub.s32 5, %s193
        %p195 = scmp.lt.s32.totalorder %s194, 2
        %s196 = scalar_select %p195, %s194, 2
        %s197 = smul.u32 128, %s196
        %p198 = scmp.lt.s32.totalorder %s193, 4
        %s199 = scalar_select %p198, %s193, 4
        %s200 = smul.addr %s199, 8
        %s201 = scalar_lea.vmem %s0, %s200
        %p202 = pneg %p38
        %p203 = pneg %p35
        %s204 = smul.u32 2, %s17
        %s205 = ssub.s32 5, %s204
        %p206 = scmp.lt.s32.totalorder %s205, 2
        %s207 = scalar_select %p206, %s205, 2
        %s208 = smul.u32 128, %s207
        %p209 = scmp.lt.s32.totalorder %s204, 4
        %s210 = scalar_select %p209, %s204, 4
        %s211 = smul.addr %s210, 8
        %s212 = scalar_lea.vmem %s1, %s211
        %p213 = pneg %p64
        %p214 = pneg %p61
        %s215 = smul.u32 2, %s17
        %s216 = ssub.s32 5, %s215
        %p217 = scmp.lt.s32.totalorder %s216, 2
        %s218 = scalar_select %p217, %s216, 2
        %s219 = smul.u32 128, %s218
        %p220 = scmp.lt.s32.totalorder %s215, 4
        %s221 = scalar_select %p220, %s215, 4
        %s222 = smul.addr %s221, 8
        %s223 = scalar_lea.vmem %s2, %s222
        %p224 = pneg %p90
        %p225 = pneg %p87
        %p226 = pneg %p116
        %p227 = pneg %p113
        %s228 = sand.u32 %s103, 1
        %s229 = scalar_lea.sflag [#allocation3], %s228
        %s230 = sand.u32 %s103, 1
        %s231 = smul.addr %s230, 8
        %s232 = scalar_lea.vmem [#allocation2], %s231
        %s233 = smul.u32 2, %s17
        %s234 = ssub.s32 5, %s233
        %p235 = scmp.lt.s32.totalorder %s234, 2
        %s236 = scalar_select %p235, %s234, 2
        %s237 = smul.u32 128, %s236
        %p238 = scmp.lt.s32.totalorder %s233, 4
        %s239 = scalar_select %p238, %s233, 4
        %s240 = smul.addr %s239, 8
        %s241 = scalar_lea.vmem %s0, %s240
        %s242 = smul.u32 2, %s17
        %s243 = ssub.s32 5, %s242
        %p244 = scmp.lt.s32.totalorder %s243, 2
        %s245 = scalar_select %p244, %s243, 2
        %s246 = smul.u32 128, %s245
        %s247 = smul.u32 2, %s17
        %s248 = ssub.s32 5, %s247
        %p249 = scmp.lt.s32.totalorder %s248, 2
        %s250 = scalar_select %p249, %s248, 2
        %s251 = smul.u32 128, %s250
        %p252 = scmp.lt.s32.totalorder %s247, 4
        %s253 = scalar_select %p252, %s247, 4
        %s254 = smul.addr %s253, 8
        %s255 = scalar_lea.vmem %s1, %s254
        %s256 = smul.u32 2, %s17
        %s257 = ssub.s32 5, %s256
        %p258 = scmp.lt.s32.totalorder %s257, 2
        %s259 = scalar_select %p258, %s257, 2
        %s260 = smul.u32 128, %s259
        %s261 = smul.u32 2, %s17
        %s262 = ssub.s32 5, %s261
        %p263 = scmp.lt.s32.totalorder %s262, 2
        %s264 = scalar_select %p263, %s262, 2
        %s265 = smul.u32 128, %s264
        %p266 = scmp.lt.s32.totalorder %s261, 4
        %s267 = scalar_select %p266, %s261, 4
        %s268 = smul.addr %s267, 8
        %s269 = scalar_lea.vmem %s2, %s268
        %s270 = smul.u32 2, %s17
        %s271 = ssub.s32 5, %s270
        %p272 = scmp.lt.s32.totalorder %s271, 2
        %s273 = scalar_select %p272, %s271, 2
        %s274 = smul.u32 128, %s273
        %v275 = vld [vmem:[%s241] sm:$0xff]
        %v276 = vld [vmem:[%s241 + $0x8] sm:$0xff]
        %v277 = vld [vmem:[%s255] sm:$0xff]
        %v278 = vld [vmem:[%s255 + $0x8] sm:$0xff]
        %v279 = vld [vmem:[%s269] sm:$0xff]
        %v280 = vld [vmem:[%s269 + $0x8] sm:$0xff]
        %v281 = vsub.f32 %v275, %v277
        %v282 = vsub.f32 %v276, %v278
        %v283 = vadd.f32 %v281, 1e-06
        %v284 = vadd.f32 %v282, 1e-06
        %v285 = vmul.f32 %v283, %v283
        %v286 = vmul.f32 %v284, %v284
        %vm287 = vcmask 261120
        %v288 = vsel %vm287, %v285, 0.0
        %289 = vadd.xlane.f32.xlu0 %v288
        %v290 = vpop.xlane.xlu0 %289
        %v291 = vsel %vm287, %v286, 0.0
        %292 = vadd.xlane.f32.xlu0 %v291
        %v293 = vpop.xlane.xlu0 %292
        %v294 = vrsqrt.pop %v290
        %v295 = vmul.f32 %v290, %v294
        %vm296 = vcmp.eq.f32.partialorder %v290, inf
        %v297 = vsel %vm296, %v290, %v295
        %vm298 = vcmp.eq.f32.partialorder %v290, 0.0
        %v299 = vand.u32 %v290, 2147483648
        %v300 = vsel %vm298, %v299, %v297
        %v301 = vrsqrt.pop %v293
        %v302 = vmul.f32 %v293, %v301
        %vm303 = vcmp.eq.f32.partialorder %v293, inf
        %v304 = vsel %vm303, %v293, %v302
        %vm305 = vcmp.eq.f32.partialorder %v293, 0.0
        %v306 = vand.u32 %v293, 2147483648
        %v307 = vsel %vm305, %v306, %v304
        %v308 = vsub.f32 1.0, %v279
        %v309 = vsub.f32 1.0, %v280
        %v310 = vmul.f32 %v308, %v290
        %v311 = vmul.f32 %v309, %v293
        %v312 = vsub.f32 2.0, %v300
        %v313 = vsub.f32 2.0, %v307
        %v314 = vmax.f32 %v312, 0.0
        %v315 = vmax.f32 %v313, 0.0
        %v316 = vmul.f32 %v314, %v314
        %v317 = vmul.f32 %v315, %v315
        %v318 = vmul.f32 %v279, %v316
        %v319 = vmul.f32 %v280, %v317
        %v320 = vadd.f32 %v310, %v318
        %v321 = vadd.f32 %v311, %v319
        %s322 = smul.u32 %s17, 16
        %v323 = vlaneseq
        %v324 = vshrl.u32 %v323, 7
        %v325 = vadd.s32 %v324, 8
        %v326 = vstv %s322
        %v327 = vadd.s32 %v326, %v324
        %v328 = vadd.s32 %v326, %v325
        %vm329 = vcmp.lt.s32.totalorder %v327, 40
        %vm330 = vcmp.lt.s32.totalorder %v328, 40
        %v331 = vsel %vm329, %v320, 0.0
        %v332 = vsel %vm330, %v321, 0.0
        %vm333 = vcmask 7168
        %v334 = vsel %vm333, %v331, 0.0
        %v335 = vsel %vm333, %v332, 0.0
        %v336 = vadd.f32 %v334, %v335
        %337 = vadd.xlane.f32.xlu0 %v336
        %v338 = vpop.xlane.xlu0 %337
        %v339 = vrot.slane %v338, 4
        %v340 = vadd.f32 %v338, %v339
        %v341 = vrot.slane %v340, 2
        %v342 = vadd.f32 %v340, %v341
        %v343 = vrot.slane %v342, 1
        %v344 = vadd.f32 %v342, %v343
        %s345 = vtos %v344
        %v346 = vlaneseq
        %v347 = vand.u32 %v346, 127
        %vm348 = vcmp.eq.s32.totalorder %v324, 0
        %vm349 = vcmp.eq.s32.totalorder %v347, 0
        %vm350 = vmand %vm348, %vm349
        %v351 = vstv %s345
        %v352 = vsel %vm350, %v351, 0.0
        %353 = vst [vmem:[%s232] sm:$0xff] %v352
        %s354 = sand.u32 %s103, 1
        %s355 = scalar_lea.sflag [#allocation3], %s354
        %s356 = sand.u32 %s103, 1
        %s357 = smul.addr %s356, 8
        %s358 = scalar_lea.vmem [#allocation2], %s357
        // Predicated region
        $region33: #{tpu_custom_call.1} parent=31 // pred_check
          %p359 = pneg %p113
        $region34: #{tpu_custom_call.1} parent=31 // pred_check_branch
          %361 = sbr.rel (%p359) target = $region36
        $region35: #{tpu_custom_call.1} parent=31 // pred_region
          %s363 = ssub.s32 128, 128
          %364 = vsyncadd %s355, %s363
          %s365 = smul.addr %s17, 128
          %s366 = scalar_lea.hbm %s3, %s365
          %s368 = sshll.u32 %s358, 4
          %s369 = int_to_ptr.vmem [resolvable:$true] %s368
          %371 = dma.vmem_to_hbm [thread:$0]  %s369, 128, %s366, %s355
        $region36: #{tpu_custom_call.1} parent=31 // pred_fallthru
          _
      $region32: #{tpu_custom_call.1} parent=5 // pred_fallthru
        _
      %p372 = scmp.le.s32.totalorder 2, %s12
      // Predicated region
      $region37: #{tpu_custom_call.1} parent=5 // pred_check
        %p373 = pneg %p372
      $region38: #{tpu_custom_call.1} parent=5 // pred_check_branch
        %375 = sbr.rel (%p373) target = $region40
      $region39: #{tpu_custom_call.1} parent=5 // pred_region
        %s376 = ssub.s32 %s12, 2
        // Predicated region
        $region41: #{tpu_custom_call.1} parent=39 // pred_check
          %p377 = pneg %p119
        $region42: #{tpu_custom_call.1} parent=39 // pred_check_branch
          %379 = sbr.rel (%p377) target = $region44
        $region43: #{tpu_custom_call.1} parent=39 // pred_region
          %s380 = sand.u32 %s104, 1
          %s381 = scalar_lea.sflag [#allocation3], %s380
          %s382 = sand.u32 %s104, 1
          %s383 = smul.addr %s382, 8
          %s384 = scalar_lea.vmem [#allocation2], %s383
          %385 = dma.done %s381, 128
        $region44: #{tpu_custom_call.1} parent=39 // pred_fallthru
          _
      $region40: #{tpu_custom_call.1} parent=5 // pred_fallthru
        _
    $region6: #{tpu_custom_call.1} parent=1 // loop_footer
      %s16 = sadd.s32 1, %s12
    $region7: #{tpu_custom_call.1} parent=1 // loop_footer_branch
      %11 = sbr.rel target = $region3
    $region8: #{tpu_custom_call.1} parent=1 // loop_exit
      _
    %386 = vsyncpa [#allocation3], 1
    %s387 = scalar_lea.sflag [#allocation3], 1
    %388 = vsyncpa %s387, 1

</llo_original>
